<compile_context>
chip_gen: v7x
topology: tpu7x:2x2x1
jax: 0.10.0
libtpu: 0.0.40
codegen_flags: <defaults>
</compile_context>

<pallas_src>
import functools

import jax
import jax.numpy as jnp
from jax.experimental import pallas as pl
from jax.experimental.pallas import tpu as pltpu

_LANES = 128
_SUBLANES = 8


def _round_up(x, m):
    return ((x + m - 1) // m) * m


def _sse_kernel(x_ref, y_ref, o_ref, acc_ref, *, rows, tile_rows,
                steps_per_split, needs_mask):
    """Accumulates sum((x - y)^2) along the reduction axis of one split."""
    p = pl.program_id(0)   # split index ("parallel": sharded across cores on v7x)
    s = pl.program_id(1)   # reduction step within the split ("arbitrary")

    @pl.when(s == 0)
    def _():
        acc_ref[...] = jnp.zeros_like(acc_ref)

    d = x_ref[...].astype(jnp.float32) - y_ref[...].astype(jnp.float32)
    sq = d * d

    if needs_mask:
        # Zero out rows beyond the logical extent (partial / phantom blocks).
        global_block = p * steps_per_split + s
        row_ids = global_block * tile_rows + jax.lax.broadcasted_iota(
            jnp.int32, (tile_rows, _LANES), 0)
        sq = jnp.where(row_ids < rows, sq, 0.0)

    # Fold the (tile_rows, 128) block into one vreg-shaped accumulator with
    # pure VPU adds; cross-lane reduction is deferred to the epilogue.
    acc_ref[...] += sq.reshape(-1, _SUBLANES, _LANES).sum(axis=0)

    @pl.when(s == pl.num_programs(1) - 1)
    def _():
        o_ref[0, 0] = jnp.sum(acc_ref[...])


def loss_rmse(outputs, label, *, max_tile_rows=2048, num_splits=2):
    """Pallas equivalent of Loss_RMSE.forward: sqrt(mean((outputs - label)**2))."""
    assert outputs.shape == label.shape
    n = int(outputs.size)

    x = outputs.reshape(-1)
    y = label.reshape(-1)

    # Process whole (8, 128) chunks in the kernel; the (< 1024 element) tail is
    # a tiny follow-up op instead of a full jnp.pad copy of both inputs.
    chunk = _SUBLANES * _LANES
    n_main = (n // chunk) * chunk
    rows = n_main // _LANES              # multiple of 8

    if n_main < n:
        xt = x[n_main:].astype(jnp.float32)
        yt = y[n_main:].astype(jnp.float32)
        tail_sse = jnp.sum((xt - yt) ** 2)
    else:
        tail_sse = jnp.float32(0.0)

    if n_main == 0:
        return jnp.sqrt(tail_sse / jnp.float32(n))

    x2d = x[:n_main].reshape(rows, _LANES)
    y2d = y[:n_main].reshape(rows, _LANES)

    # Big lane-dense blocks; tile_rows is always a multiple of 8 and <= rows.
    tile_rows = min(_round_up(max_tile_rows, _SUBLANES), rows)
    total_blocks = pl.cdiv(rows, tile_rows)
    n_splits = max(1, min(num_splits, total_blocks))
    steps_per_split = pl.cdiv(total_blocks, n_splits)
    # Masking is needed whenever the grid covers more rows than exist
    # (partial last block and/or phantom blocks from uneven splitting).
    needs_mask = (n_splits * steps_per_split * tile_rows) != rows

    if n_splits * steps_per_split > total_blocks:
        # Clamp phantom block indices back in range; their contribution is
        # zeroed by the in-kernel mask.
        def in_map(p, s):
            blk = p * steps_per_split + s
            return (jnp.minimum(blk, total_blocks - 1), 0)
    else:
        def in_map(p, s):
            return (p * steps_per_split + s, 0)

    kernel = functools.partial(
        _sse_kernel, rows=rows, tile_rows=tile_rows,
        steps_per_split=steps_per_split, needs_mask=needs_mask)

    partial_sse = pl.pallas_call(
        kernel,
        out_shape=jax.ShapeDtypeStruct((n_splits, 1), jnp.float32),
        grid=(n_splits, steps_per_split),
        in_specs=[
            pl.BlockSpec((tile_rows, _LANES), in_map),
            pl.BlockSpec((tile_rows, _LANES), in_map),
        ],
        out_specs=pl.BlockSpec((1, 1), lambda p, s: (p, 0),
                               memory_space=pltpu.SMEM),
        scratch_shapes=[pltpu.VMEM((_SUBLANES, _LANES), jnp.float32)],
        compiler_params=pltpu.CompilerParams(
            dimension_semantics=("parallel", "arbitrary")),
    )(x2d, y2d)

    sse = jnp.sum(partial_sse) + tail_sse
    return jnp.sqrt(sse / jnp.float32(n))


if __name__ == "__main__":
    key = jax.random.PRNGKey(0)
    k1, k2, k3, k4 = jax.random.split(key, 4)

    # 1) Main case: NCHW spectral-recovery-like output/label pair (aligned).
    shape = (2, 4, 16, 16)
    outputs = jax.random.normal(k1, shape, dtype=jnp.float32)
    label = jax.random.normal(k2, shape, dtype=jnp.float32)
    rmse = jax.block_until_ready(loss_rmse(outputs, label))
    ref = jnp.sqrt(jnp.mean((outputs - label) ** 2))
    assert jnp.allclose(rmse, ref, rtol=1e-5, atol=1e-6), (rmse, ref)

    # 2) Ragged case exercising the tail + in-kernel mask + clamped index map.
    shape2 = (1, 3, 40, 127)
    o2 = jax.random.normal(k3, shape2, dtype=jnp.float32)
    l2 = jax.random.normal(k4, shape2, dtype=jnp.float32)
    rmse2 = jax.block_until_ready(loss_rmse(o2, l2, max_tile_rows=40))
    ref2 = jnp.sqrt(jnp.mean((o2 - l2) ** 2))
    assert jnp.allclose(rmse2, ref2, rtol=1e-5, atol=1e-6), (rmse2, ref2)

    print("KERNEL_OK")
</pallas_src>

<mosaic_0001>
module attributes {stable_mosaic.version = 11 : i64} {
  func.func @_sse_kernel(%arg0: i32, %arg1: i32, %arg2: memref<16x128xf32, #tpu.memory_space<vmem>>, %arg3: memref<16x128xf32, #tpu.memory_space<vmem>>, %arg4: memref<1x1xf32, #tpu.memory_space<smem>>, %arg5: memref<8x128xf32, #tpu.memory_space<vmem>>) attributes {dimension_semantics = [#tpu.dimension_semantics<parallel>, #tpu.dimension_semantics<arbitrary>], iteration_bounds = array<i64: 1, 1>, scalar_prefetch = 0 : i64, scratch_operands = 1 : i64, tpu.core_type = #tpu.core_type<tc>, window_params = [{transform_indices = @transform_0, window_bounds = array<i64: 16, 128>}, {transform_indices = @transform_1, window_bounds = array<i64: 16, 128>}, {transform_indices = @transform_2, window_bounds = array<i64: 1, 1>}]} {
    %c0_i32 = arith.constant 0 : i32
    %0 = arith.cmpi eq, %arg1, %c0_i32 : i32
    %1 = arith.extui %0 : i1 to i32
    %c0_i32_0 = arith.constant 0 : i32
    %2 = arith.cmpi ne, %1, %c0_i32_0 : i32
    scf.if %2 {
      %cst_10 = arith.constant 0.000000e+00 : f32
      %15 = vector.broadcast %cst_10 : f32 to vector<8x128xf32>
      %c0_11 = arith.constant 0 : index
      %c0_12 = arith.constant 0 : index
      %16 = vector.load %arg5[%c0_11, %c0_12] : memref<8x128xf32, #tpu.memory_space<vmem>>, vector<8x128xf32>
      tpu.vector_store %arg5[%c0_11, %c0_12], %15 {strides = array<i32>} : memref<8x128xf32, #tpu.memory_space<vmem>>, vector<8x128xf32>,
    } else {
    }
    %c0 = arith.constant 0 : index
    %c0_1 = arith.constant 0 : index
    %3 = vector.load %arg2[%c0, %c0_1] : memref<16x128xf32, #tpu.memory_space<vmem>>, vector<16x128xf32>
    %c0_2 = arith.constant 0 : index
    %c0_3 = arith.constant 0 : index
    %4 = vector.load %arg3[%c0_2, %c0_3] : memref<16x128xf32, #tpu.memory_space<vmem>>, vector<16x128xf32>
    %5 = arith.subf %3, %4 : vector<16x128xf32>
    %6 = arith.mulf %5, %5 : vector<16x128xf32>
    %c0_4 = arith.constant 0 : index
    %c0_5 = arith.constant 0 : index
    %7 = vector.load %arg5[%c0_4, %c0_5] : memref<8x128xf32, #tpu.memory_space<vmem>>, vector<8x128xf32>
    %8 = vector.shape_cast %6 : vector<16x128xf32> to vector<2x8x128xf32>
    %cst = arith.constant dense<0.000000e+00> : vector<8x128xf32>
    %9 = vector.multi_reduction <add>, %8, %cst [0] : vector<2x8x128xf32> to vector<8x128xf32>
    %10 = arith.addf %7, %9 : vector<8x128xf32>
    %c0_6 = arith.constant 0 : index
    %c0_7 = arith.constant 0 : index
    %11 = vector.load %arg5[%c0_6, %c0_7] : memref<8x128xf32, #tpu.memory_space<vmem>>, vector<8x128xf32>
    tpu.vector_store %arg5[%c0_6, %c0_7], %10 {strides = array<i32>} : memref<8x128xf32, #tpu.memory_space<vmem>>, vector<8x128xf32>,
    %c0_i32_8 = arith.constant 0 : i32
    %12 = arith.cmpi eq, %arg1, %c0_i32_8 : i32
    %13 = arith.extui %12 : i1 to i32
    %c0_i32_9 = arith.constant 0 : i32
    %14 = arith.cmpi ne, %13, %c0_i32_9 : i32
    scf.if %14 {
      %c0_10 = arith.constant 0 : index
      %c0_11 = arith.constant 0 : index
      %15 = vector.load %arg5[%c0_10, %c0_11] : memref<8x128xf32, #tpu.memory_space<vmem>>, vector<8x128xf32>
      %16 = vector.shape_cast %15 : vector<8x128xf32> to vector<1x8x128xf32>
      %cst_12 = arith.constant dense<0.000000e+00> : vector<1xf32>
      %17 = vector.multi_reduction <add>, %16, %cst_12 [1, 2] : vector<1x8x128xf32> to vector<1xf32>
      %18 = vector.shape_cast %17 : vector<1xf32> to vector<1x1x1xf32>
      %19 = vector.extract %18[0, 0, 0] : f32 from vector<1x1x1xf32>
      %c0_13 = arith.constant 0 : index
      %c0_14 = arith.constant 0 : index
      %20 = memref.load %arg4[%c0_13, %c0_14] : memref<1x1xf32, #tpu.memory_space<smem>>
      memref.store %19, %arg4[%c0_13, %c0_14] : memref<1x1xf32, #tpu.memory_space<smem>>
    } else {
    }
    return
  }
  func.func @transform_0(%arg0: i32, %arg1: i32) -> (i32, i32) {
    %c1_i32 = arith.constant 1 : i32
    %0 = arith.muli %arg0, %c1_i32 : i32
    %1 = arith.addi %0, %arg1 : i32
    %c0_i32 = arith.constant 0 : i32
    %c0_i32_0 = arith.constant 0 : i32
    return %1, %c0_i32 : i32, i32
  }
  func.func @transform_1(%arg0: i32, %arg1: i32) -> (i32, i32) {
    %c1_i32 = arith.constant 1 : i32
    %0 = arith.muli %arg0, %c1_i32 : i32
    %1 = arith.addi %0, %arg1 : i32
    %c0_i32 = arith.constant 0 : i32
    %c0_i32_0 = arith.constant 0 : i32
    return %1, %c0_i32 : i32, i32
  }
  func.func @transform_2(%arg0: i32, %arg1: i32) -> (i32, i32) {
    %c0_i32 = arith.constant 0 : i32
    %c0_i32_0 = arith.constant 0 : i32
    return %arg0, %c0_i32 : i32, i32
  }
}

</mosaic_0001>

<llo_original>
// kernel: tpu_custom_call.1
$region0: #{tpu_custom_call.1}
  #allocation0 [shape = 'u32[]', space=smem, size = 0x4, offset = 0x4, fixed_abs, tag = 'smem constant byte address 0x4 - core index']
  #allocation1 [shape = 'u32[144,128]{1,0:T(1,128)}', space=vmem, size = 0x12000, scoped, tag = 'internal scratch']
  #allocation2 [shape = 'f32[8,128]{1,0:T(8,128)}', space=vmem, size = 0x1000, scoped, tag = 'scratch operand']
  %s0 = inlined_call_operand.hbm [shape: f32[16,128], index: 0, kind: input, shape index: {}]
  %s1 = inlined_call_operand.hbm [shape: f32[16,128], index: 1, kind: input, shape index: {}]
  %s2 = inlined_call_operand.hbm [shape: f32[1,1], index: 2, kind: output, shape index: {}]
  %s3 = sld [smem:[#allocation0]]
  $region34: #{tpu_custom_call.1} parent=0
    _
  %s5 = ssub.s32 1, %s3
  %s6 = scalar_select 0, %s5, %s3
  $region1: #{tpu_custom_call.1} parent=0
    #allocation3 [shape = 'u8[8192]{0}', space=vmem, size = 0x2000, scoped, tag = 'input window, operand 0, single buffered']
    #allocation4 [shape = 's32[1]{0}', space=sflag, size = 0x4, scoped, tag = 'scoped memory for tpu_custom_call.1']
    #allocation5 [shape = 's32[1]{0}', space=sflag, size = 0x4, scoped, tag = 'scoped memory for tpu_custom_call.1']
    #allocation6 [shape = 'u8[8192]{0}', space=vmem, size = 0x2000, scoped, tag = 'input window, operand 1, single buffered']
    #allocation7 [shape = 's32[1]{0}', space=sflag, size = 0x4, scoped, tag = 'scoped memory for tpu_custom_call.1']
    #allocation8 [shape = 'u8[512]{0}', space=smem, size = 0x200, scoped, tag = 'output window, operand 0, single buffered']
    %7 = vsyncpa [#allocation4], 0
    %8 = vsyncpa [#allocation7], 0
    %9 = vsyncpa [#allocation5], 0
    // Predicated region
    $region2: #{tpu_custom_call.1} parent=1 // pred_check
      _
    $region3: #{tpu_custom_call.1} parent=1 // pred_check_branch
      %11 = sbr.rel (0) target = $region5
    $region4: #{tpu_custom_call.1} parent=1 // pred_region
      %s12 = sadd.s32 0, 0
      %s13 = smul.u32 2, %s12
      %s15 = ssub.s32 256, 256
      %16 = vsyncadd [#allocation4], %s15
      %s17 = smul.addr %s13, 128
      %s18 = scalar_lea.hbm %s0, %s17
      %s19 = sshll.u32 [#allocation3], 4
      %s20 = int_to_ptr.vmem [resolvable:$true] %s19
      %25 = dma.hbm_to_vmem [thread:$0]  %s18, 256, %s20, [#allocation4], 128, 128, 8
    $region5: #{tpu_custom_call.1} parent=1 // pred_fallthru
      _
    // Predicated region
    $region6: #{tpu_custom_call.1} parent=1 // pred_check
      _
    $region7: #{tpu_custom_call.1} parent=1 // pred_check_branch
      %27 = sbr.rel (0) target = $region9
    $region8: #{tpu_custom_call.1} parent=1 // pred_region
      %s28 = sadd.s32 0, 0
      %s29 = smul.u32 2, %s28
      %s31 = ssub.s32 256, 256
      %32 = vsyncadd [#allocation7], %s31
      %s33 = smul.addr %s29, 128
      %s34 = scalar_lea.hbm %s1, %s33
      %s35 = sshll.u32 [#allocation6], 4
      %s36 = int_to_ptr.vmem [resolvable:$true] %s35
      %41 = dma.hbm_to_vmem [thread:$0]  %s34, 256, %s36, [#allocation7], 128, 128, 8
    $region9: #{tpu_custom_call.1} parent=1 // pred_fallthru
      _
    // Predicated region
    $region10: #{tpu_custom_call.1} parent=1 // pred_check
      _
    $region11: #{tpu_custom_call.1} parent=1 // pred_check_branch
      %43 = sbr.rel (0) target = $region13
    $region12: #{tpu_custom_call.1} parent=1 // pred_region
      %44 = dma.done [#allocation4], 256
    $region13: #{tpu_custom_call.1} parent=1 // pred_fallthru
      _
    // Predicated region
    $region14: #{tpu_custom_call.1} parent=1 // pred_check
      _
    $region15: #{tpu_custom_call.1} parent=1 // pred_check_branch
      %46 = sbr.rel (0) target = $region17
    $region16: #{tpu_custom_call.1} parent=1 // pred_region
      %47 = dma.done [#allocation7], 256
    $region17: #{tpu_custom_call.1} parent=1 // pred_fallthru
      _
    %s48 = sadd.s32 0, 0
    %s49 = smul.u32 2, %s48
    %s50 = sadd.s32 0, 0
    %s51 = smul.u32 2, %s50
    %p52 = scmp.eq.s32.totalorder 0, 0
    // Predicated region
    $region18: #{tpu_custom_call.1} parent=1 // pred_check
      %p53 = pneg %p52
    $region19: #{tpu_custom_call.1} parent=1 // pred_check_branch
      %55 = sbr.rel (%p53) target = $region21
    $region20: #{tpu_custom_call.1} parent=1 // pred_region
      %56 = vst [vmem:[#allocation2] sm:$0xff] 0.0
    $region21: #{tpu_custom_call.1} parent=1 // pred_fallthru
      _
    %v57 = vld [vmem:[#allocation3] sm:$0xff]
    %v58 = vld [vmem:[#allocation3 + $0x8] sm:$0xff]
    %v59 = vld [vmem:[#allocation6] sm:$0xff]
    %v60 = vld [vmem:[#allocation6 + $0x8] sm:$0xff]
    %v61 = vsub.f32 %v57, %v59
    %v62 = vsub.f32 %v58, %v60
    %v63 = vmul.f32 %v61, %v61
    %v64 = vmul.f32 %v62, %v62
    %v65 = vld [vmem:[#allocation2] sm:$0xff]
    %v66 = vadd.f32 %v63, %v64
    %v67 = vadd.f32 %v65, %v66
    %68 = vst [vmem:[#allocation2] sm:$0xff] %v67
    // Predicated region
    $region22: #{tpu_custom_call.1} parent=1 // pred_check
      %p69 = pneg %p52
    $region23: #{tpu_custom_call.1} parent=1 // pred_check_branch
      %71 = sbr.rel (%p69) target = $region25
    $region24: #{tpu_custom_call.1} parent=1 // pred_region
      %v72 = vld [vmem:[#allocation2] sm:$0xff]
      %73 = vadd.xlane.f32.xlu0 %v72
      %v74 = vpop.xlane.xlu0 %73
      %v75 = vrot.slane %v74, 4
      %v76 = vadd.f32 %v74, %v75
      %v77 = vrot.slane %v76, 2
      %v78 = vadd.f32 %v76, %v77
      %v79 = vrot.slane %v78, 1
      %v80 = vadd.f32 %v78, %v79
      %s81 = vtos %v80
      %s82 = scalar_lea.smem [#allocation8], 0
      %83 = sst [smem:[%s82]] %s81
    $region25: #{tpu_custom_call.1} parent=1 // pred_fallthru
      _
    // Predicated region
    $region26: #{tpu_custom_call.1} parent=1 // pred_check
      _
    $region27: #{tpu_custom_call.1} parent=1 // pred_check_branch
      %85 = sbr.rel (0) target = $region29
    $region28: #{tpu_custom_call.1} parent=1 // pred_region
      %s87 = ssub.s32 16, 16
      %88 = vsyncadd [#allocation5], %s87
      %91 = dma.smem_to_hbm [#allocation8], 16, %s2, [#allocation5]
    $region29: #{tpu_custom_call.1} parent=1 // pred_fallthru
      _
    // Predicated region
    $region30: #{tpu_custom_call.1} parent=1 // pred_check
      _
    $region31: #{tpu_custom_call.1} parent=1 // pred_check_branch
      %93 = sbr.rel (0) target = $region33
    $region32: #{tpu_custom_call.1} parent=1 // pred_region
      %94 = dma.done [#allocation5], 16
    $region33: #{tpu_custom_call.1} parent=1 // pred_fallthru
      _
    %95 = sfence
    %96 = vsyncpa [#allocation4], 1
    %97 = vsyncpa [#allocation7], 1
    %98 = vsyncpa [#allocation5], 1

</llo_original>
